<compile_context>
chip_gen: v7x
topology: tpu7x:2x2x1
jax: 0.10.0
libtpu: 0.0.40
codegen_flags: <defaults>
</compile_context>

<pallas_src>
import functools

import jax
import jax.numpy as jnp
from jax.experimental import pallas as pl
from jax.experimental.pallas import tpu as pltpu

LANE = 128
SUBLANE = 8
NEG_BIG = -1e30  # finite "-inf" for padded class lanes (exp underflows to 0)


def _round_up(v, m):
    return ((v + m - 1) // m) * m


def _log_softmax_rows(logits_f32):
    m = jnp.max(logits_f32, axis=-1, keepdims=True)
    shifted = logits_f32 - m
    lse = jnp.log(jnp.sum(jnp.exp(shifted), axis=-1, keepdims=True))
    return shifted - lse


def prediction_kernel_flat(x_ref, w_ref, b_ref, o_ref):
    """Mean-pool folded into one lane-dense MXU matmul + bias + log_softmax.

    x_ref : (TB, N*D)     flattened node features (any float dtype)
    w_ref : (N*D, O_pad)  head weight, tiled N times, pre-scaled by 1/N, 0-padded
    b_ref : (1, O_pad)    bias, padded lanes = NEG_BIG
    o_ref : (TB, O_pad)   log-probabilities (padded lanes sliced off outside)
    """
    logits = jnp.dot(x_ref[...].astype(jnp.float32), w_ref[...],
                     preferred_element_type=jnp.float32) + b_ref[...]
    o_ref[...] = _log_softmax_rows(logits).astype(o_ref.dtype)


def prediction_kernel_pooled(x_ref, w_ref, b_ref, o_ref, *, inv_n, node_chunk):
    """Fallback for very large N*D: chunked sum-pool + Linear + log_softmax.

    x_ref : (TB, N, D), w_ref : (D, O_pad), b_ref : (1, O_pad), o_ref : (TB, O_pad)
    """
    tb, n, d = x_ref.shape
    acc = jnp.zeros((tb, d), jnp.float32)
    for lo in range(0, n, node_chunk):          # static chunks; bounds f32 temp
        hi = min(n, lo + node_chunk)
        acc = acc + jnp.sum(x_ref[:, lo:hi, :].astype(jnp.float32), axis=1)
    logits = jnp.dot(acc, w_ref[...], preferred_element_type=jnp.float32)
    logits = logits * inv_n + b_ref[...]        # mean scale + bias
    o_ref[...] = _log_softmax_rows(logits).astype(o_ref.dtype)


def prediction_model_forward(x, w_t, b, *, block_b=None):
    """x: (B, N, D) float, w_t: (D, O), b: (O,) -> (B, O) log-probs (f32)."""
    B, N, D = x.shape
    O = w_t.shape[1]
    O_pad = max(LANE, pl.cdiv(O, LANE) * LANE)
    inv_n = 1.0 / float(N)

    # ---- generation-aware VMEM budget --------------------------------------
    # v5e/v6e: 128 MiB physical -> ~96 MiB limit; v7x: 64 MiB -> ~48 MiB limit.
    try:
        info = pltpu.get_tpu_info()
        vmem_cap = int(getattr(info, "vmem_capacity_bytes", 0)) or (64 << 20)
    except Exception:
        vmem_cap = 64 << 20                     # conservative (v7x) fallback
    vmem_cap = max(vmem_cap, 32 << 20)
    vmem_limit = int(min(vmem_cap * 3 // 4, 100 << 20))
    # per-input-buffer x budget: 2 input buffers + f32 upcast temp + resident
    # weights + double-buffered output must all fit under vmem_limit.
    x_budget = vmem_limit // 6

    # ---- pad the head once, outside the hot loop ---------------------------
    # Zero weight columns + NEG_BIG bias => padded logits ~ -inf (exp -> 0).
    w_pad = jnp.zeros((D, O_pad), jnp.float32).at[:, :O].set(
        w_t.astype(jnp.float32))
    b_pad = jnp.full((1, O_pad), NEG_BIG, jnp.float32).at[0, :O].set(
        b.astype(jnp.float32))

    # ---- batch tile selection ----------------------------------------------
    row_in_bytes = N * D * x.dtype.itemsize
    row_f32_bytes = N * D * 4
    # account for the in-kernel f32 upcast temp when streaming bf16/f16 x
    eff_row_bytes = row_in_bytes + (0 if x.dtype == jnp.float32 else row_f32_bytes)
    fit = max(SUBLANE, (x_budget // max(1, eff_row_bytes)) // SUBLANE * SUBLANE)
    if block_b is not None:
        TB = max(SUBLANE, _round_up(min(block_b, B), SUBLANE))
    elif fit >= B:
        # whole batch would fit one tile: still give the grid >=2 steps (when
        # B > 8) so both v7x TensorCores get work under "parallel" semantics.
        TB = min(fit, max(SUBLANE, _round_up(pl.cdiv(B, 2), SUBLANE)))
    else:
        TB = fit
    B_pad = _round_up(max(B, TB), TB)
    grid = (B_pad // TB,)

    if B_pad != B:   # zero-pad so no grid step touches unspecified rows
        x = jnp.concatenate(
            [x, jnp.zeros((B_pad - B, N, D), x.dtype)], axis=0)

    # ---- choose formulation -------------------------------------------------
    # Flat (lane-dense) path: fold the node mean-pool into the MXU matmul by
    # tiling the (1/N-scaled) weight N times.  Use it while that weight stays
    # comfortably VMEM-resident.
    use_flat = (N * D * O_pad * 4) <= (4 << 20)

    if use_flat:
        ND = N * D
        x_in = x.reshape(B_pad, ND)                       # lane-dense input
        w_in = jnp.tile(w_pad * inv_n, (N, 1))            # (N*D, O_pad)
        kern = prediction_kernel_flat
        in_specs = [
            pl.BlockSpec((TB, ND), lambda i: (i, 0)),     # x: batch-tiled
            pl.BlockSpec((ND, O_pad), lambda i: (0, 0)),  # weight: resident
            pl.BlockSpec((1, O_pad), lambda i: (0, 0)),   # bias:   resident
        ]
        flops = 2 * B_pad * ND * O_pad
        bytes_acc = (B_pad * ND * x.dtype.itemsize + ND * O_pad * 4
                     + O_pad * 4 + B_pad * O_pad * 4)
    else:
        # TODO(synk): for very large N, add a second "arbitrary" grid axis over
        # node chunks with a (TB, D) accumulator scratch instead of one block.
        node_chunk = max(1, min(N, (2 << 20) // max(1, TB * D * 4)))
        x_in = x
        w_in = w_pad
        kern = functools.partial(prediction_kernel_pooled,
                                 inv_n=inv_n, node_chunk=node_chunk)
        in_specs = [
            pl.BlockSpec((TB, N, D), lambda i: (i, 0, 0)),
            pl.BlockSpec((D, O_pad), lambda i: (0, 0)),
            pl.BlockSpec((1, O_pad), lambda i: (0, 0)),
        ]
        flops = 2 * B_pad * D * O_pad + B_pad * N * D
        bytes_acc = (B_pad * N * D * x.dtype.itemsize + D * O_pad * 4
                     + O_pad * 4 + B_pad * O_pad * 4)

    cost = pl.CostEstimate(flops=int(flops),
                           transcendentals=int(B_pad * O_pad),
                           bytes_accessed=int(bytes_acc))

    out_pad = pl.pallas_call(
        kern,
        out_shape=jax.ShapeDtypeStruct((B_pad, O_pad), jnp.float32),
        grid=grid,
        in_specs=in_specs,
        out_specs=pl.BlockSpec((TB, O_pad), lambda i: (i, 0)),
        compiler_params=pltpu.CompilerParams(
            dimension_semantics=("parallel",),
            vmem_limit_bytes=vmem_limit,
        ),
        cost_estimate=cost,
    )(x_in, w_in, b_pad)

    return out_pad[:B, :O]


if __name__ == "__main__":
    # Small shapes consistent with the module: graph batch of 16, 16 nodes,
    # embedding dim 32, out_dim (num classes) 16.  B=16 gives a 2-step grid so
    # both v7x TensorCores are exercised.
    B, N, D, O = 16, 16, 32, 16

    key = jax.random.PRNGKey(0)
    kx, kw, kb = jax.random.split(key, 3)

    x = jax.random.normal(kx, (B, N, D), dtype=jnp.float32)

    # Deterministic parameter init mimicking nn.Linear(dim, out_dim):
    # torch stores weight as (out_dim, dim); we keep it transposed (dim, out_dim).
    bound = 1.0 / (D ** 0.5)
    w_t = jax.random.uniform(kw, (D, O), minval=-bound, maxval=bound,
                             dtype=jnp.float32)
    b = jax.random.uniform(kb, (O,), minval=-bound, maxval=bound,
                           dtype=jnp.float32)

    out = prediction_model_forward(x, w_t, b)
    out = jax.block_until_ready(out)

    # Sanity check against a pure-JAX reference.
    zg_ref = jnp.mean(x, axis=1)
    logits_ref = zg_ref @ w_t + b
    ref = jax.nn.log_softmax(logits_ref, axis=-1)
    assert out.shape == (B, O)
    assert jnp.allclose(out, ref, atol=1e-5, rtol=1e-5), (
        float(jnp.max(jnp.abs(out - ref))))

    print("KERNEL_OK")
</pallas_src>

<mosaic_0001>
module attributes {stable_mosaic.version = 11 : i64} {
  func.func @prediction_kernel_flat(%arg0: i32, %arg1: memref<8x512xf32, #tpu.memory_space<vmem>>, %arg2: memref<512x128xf32, #tpu.memory_space<vmem>>, %arg3: memref<1x128xf32, #tpu.memory_space<vmem>>, %arg4: memref<8x128xf32, #tpu.memory_space<vmem>>) attributes {dimension_semantics = [#tpu.dimension_semantics<parallel>], iteration_bounds = array<i64: 2>, scalar_prefetch = 0 : i64, scratch_operands = 0 : i64, tpu.core_type = #tpu.core_type<tc>, window_params = [{transform_indices = @transform_0, window_bounds = array<i64: 8, 512>}, {pipeline_mode = #tpu.pipeline_mode<synchronous>, transform_indices = @transform_1, window_bounds = array<i64: 512, 128>}, {pipeline_mode = #tpu.pipeline_mode<synchronous>, transform_indices = @transform_2, window_bounds = array<i64: 1, 128>}, {transform_indices = @transform_3, window_bounds = array<i64: 8, 128>}]} {
    %c0 = arith.constant 0 : index
    %c0_0 = arith.constant 0 : index
    %0 = vector.load %arg1[%c0, %c0_0] : memref<8x512xf32, #tpu.memory_space<vmem>>, vector<8x512xf32>
    %c0_1 = arith.constant 0 : index
    %c0_2 = arith.constant 0 : index
    %1 = vector.load %arg2[%c0_1, %c0_2] : memref<512x128xf32, #tpu.memory_space<vmem>>, vector<512x128xf32>
    %cst = arith.constant dense<0.000000e+00> : vector<8x128xf32>
    %2 = tpu.matmul %0, %1, %cst {dimension_numbers = #tpu.dot_dimension_numbers<[1], [0], [0], [1], [0, 0, 1, 1], [], []>} : vector<8x512xf32>, vector<512x128xf32>, vector<8x128xf32> -> vector<8x128xf32>
    %c0_3 = arith.constant 0 : index
    %c0_4 = arith.constant 0 : index
    %3 = vector.load %arg3[%c0_3, %c0_4] : memref<1x128xf32, #tpu.memory_space<vmem>>, vector<1x128xf32>
    %4 = vector.broadcast %3 : vector<1x128xf32> to vector<8x128xf32>
    %5 = arith.addf %2, %4 : vector<8x128xf32>
    %cst_5 = arith.constant dense<0xFF800000> : vector<8xf32>
    %6 = vector.multi_reduction <maximumf>, %5, %cst_5 [1] : vector<8x128xf32> to vector<8xf32>
    %7 = vector.shape_cast %6 : vector<8xf32> to vector<8x1xf32>
    %8 = vector.broadcast %7 : vector<8x1xf32> to vector<8x128xf32>
    %9 = arith.subf %5, %8 : vector<8x128xf32>
    %10 = math.exp %9 : vector<8x128xf32>
    %cst_6 = arith.constant dense<0.000000e+00> : vector<8xf32>
    %11 = vector.multi_reduction <add>, %10, %cst_6 [1] : vector<8x128xf32> to vector<8xf32>
    %12 = vector.shape_cast %11 : vector<8xf32> to vector<8x1xf32>
    %13 = math.log %12 : vector<8x1xf32>
    %14 = vector.broadcast %13 : vector<8x1xf32> to vector<8x128xf32>
    %15 = arith.subf %9, %14 : vector<8x128xf32>
    %c0_7 = arith.constant 0 : index
    %c0_8 = arith.constant 0 : index
    %16 = vector.load %arg4[%c0_7, %c0_8] : memref<8x128xf32, #tpu.memory_space<vmem>>, vector<8x128xf32>
    tpu.vector_store %arg4[%c0_7, %c0_8], %15 {strides = array<i32>} : memref<8x128xf32, #tpu.memory_space<vmem>>, vector<8x128xf32>,
    return
  }
  func.func @transform_0(%arg0: i32) -> (i32, i32) {
    %c0_i32 = arith.constant 0 : i32
    %c0_i32_0 = arith.constant 0 : i32
    return %arg0, %c0_i32 : i32, i32
  }
  func.func @transform_1(%arg0: i32) -> (i32, i32) {
    %c0_i32 = arith.constant 0 : i32
    %c0_i32_0 = arith.constant 0 : i32
    %c0_i32_1 = arith.constant 0 : i32
    return %c0_i32, %c0_i32_0 : i32, i32
  }
  func.func @transform_2(%arg0: i32) -> (i32, i32) {
    %c0_i32 = arith.constant 0 : i32
    %c0_i32_0 = arith.constant 0 : i32
    %c0_i32_1 = arith.constant 0 : i32
    return %c0_i32, %c0_i32_0 : i32, i32
  }
  func.func @transform_3(%arg0: i32) -> (i32, i32) {
    %c0_i32 = arith.constant 0 : i32
    %c0_i32_0 = arith.constant 0 : i32
    return %arg0, %c0_i32 : i32, i32
  }
}

</mosaic_0001>

<llo_original>
// kernel: tpu_custom_call.1
$region0: #{tpu_custom_call.1}
  #allocation0 [shape = 'u32[]', space=smem, size = 0x4, offset = 0x4, fixed_abs, tag = 'smem constant byte address 0x4 - core index']
  #allocation1 [shape = 'u32[144,128]{1,0:T(1,128)}', space=vmem, size = 0x12000, scoped, tag = 'internal scratch']
  %s0 = inlined_call_operand.hbm [shape: f32[16,512], index: 0, kind: input, shape index: {}]
  %s1 = inlined_call_operand.hbm [shape: f32[512,128], index: 1, kind: input, shape index: {}]
  %s2 = inlined_call_operand.vmem [shape: f32[1,128], index: 2, kind: input, shape index: {}]
  %s3 = inlined_call_operand.hbm [shape: f32[16,128], index: 3, kind: output, shape index: {}]
  %s4 = sld [smem:[#allocation0]]
  $region53: #{tpu_custom_call.1} parent=0
    _
  %s6 = ssub.s32 1, %s4
  %s7 = scalar_select 0, %s6, %s4
  $region1: #{tpu_custom_call.1} parent=0
    #allocation2 [shape = 'u8[32768]{0}', space=vmem, size = 0x8000, scoped, tag = 'input window, operand 0']
    #allocation3 [shape = 's32[2]{0}', space=sflag, size = 0x8, scoped, tag = 'scoped memory for tpu_custom_call.1']
    #allocation4 [shape = 's32[2]{0}', space=sflag, size = 0x8, scoped, tag = 'scoped memory for tpu_custom_call.1']
    #allocation5 [shape = 'u8[262144]{0}', space=vmem, size = 0x40000, scoped, tag = 'input window, operand 1, single buffered']
    #allocation6 [shape = 's32[1]{0}', space=sflag, size = 0x4, scoped, tag = 'scoped memory for tpu_custom_call.1']
    #allocation7 [shape = 'u8[8192]{0}', space=vmem, size = 0x2000, scoped, tag = 'output window, operand 0']
    %8 = vsyncpa [#allocation3], 0
    %s9 = scalar_lea.sflag [#allocation3], 1
    %10 = vsyncpa %s9, 0
    %11 = vsyncpa [#allocation6], 0
    %12 = vsyncpa [#allocation4], 0
    %s13 = scalar_lea.sflag [#allocation4], 1
    %14 = vsyncpa %s13, 0
    loop: start=0, step=1, limit=4
    $region2: #{tpu_custom_call.1} parent=1 // loop_pre_header
      _
    $region3: #{tpu_custom_call.1} parent=1 // loop_header
      %s16 = sphi 0, %s20
      %p17 = scmp.ge.s32.totalorder %s16, 4
      %s26 = sphi 0, %s28
      %s29 = sphi 0, %s26
      %s30 = sphi 0, %s29
      %s46 = sphi 0, %s30
      %s50 = sphi 0, %s50
      %s52 = sphi 0, %s50
      %s53 = sphi 0, %s52
      %s67 = sphi 0, %s53
      %s71 = sphi 0, %s71
      %s73 = sphi 0, %s71
      %s74 = sphi 0, %s73
      %s88 = sphi 0, %s74
      %s94 = sphi 0, %s96
      %s97 = sphi 0, %s94
      %s98 = sphi 0, %s97
      %s114 = sphi 0, %s98
    $region4: #{tpu_custom_call.1} parent=1 // loop_header_branch
      %19 = sbr.rel (%p17) target = $region8
    $region5: #{tpu_custom_call.1} parent=1 // loop_body
      %s21 = ssub.s32 %s16, 1
      %s22 = ssub.s32 %s16, 2
      %s23 = sadd.s32 %s16, 1
      %s24 = ssub.s32 %s16, %s23
      %p25 = scmp.eq.s32.totalorder %s24, 0
      %s27 = sadd.s32 %s26, 1
      %s28 = scalar_select %p25, %s26, %s27
      %p31 = pneg %p25
      %p32 = scmp.eq.s32.totalorder %s16, 1
      %p33 = por %p31, %p32
      %p34 = scmp.ne.s32.totalorder %s26, %s29
      %p35 = scmp.eq.s32.totalorder %s16, 0
      %p36 = por %p34, %p35
      %p37 = scmp.ne.s32.totalorder %s26, %s29
      %p38 = scmp.eq.s32.totalorder %s21, 1
      %p39 = por %p37, %p38
      %p40 = scmp.ne.s32.totalorder %s29, %s30
      %p41 = scmp.eq.s32.totalorder %s21, 0
      %p42 = por %p40, %p41
      %p43 = scmp.ne.s32.totalorder %s29, %s30
      %p44 = scmp.eq.s32.totalorder %s22, 1
      %p45 = por %p43, %p44
      %p47 = scmp.ne.s32.totalorder %s30, %s46
      %p48 = scmp.eq.s32.totalorder %s22, 0
      %p49 = por %p47, %p48
      %s51 = sadd.s32 %s50, 1
      %p54 = scmp.eq.s32.totalorder %s16, 1
      %p55 = scmp.ne.s32.totalorder %s50, %s52
      %p56 = scmp.eq.s32.totalorder %s16, 0
      %p57 = por %p55, %p56
      %p58 = scmp.ne.s32.totalorder %s50, %s52
      %p59 = scmp.eq.s32.totalorder %s21, 1
      %p60 = por %p58, %p59
      %p61 = scmp.ne.s32.totalorder %s52, %s53
      %p62 = scmp.eq.s32.totalorder %s21, 0
      %p63 = por %p61, %p62
      %p64 = scmp.ne.s32.totalorder %s52, %s53
      %p65 = scmp.eq.s32.totalorder %s22, 1
      %p66 = por %p64, %p65
      %p68 = scmp.ne.s32.totalorder %s53, %s67
      %p69 = scmp.eq.s32.totalorder %s22, 0
      %p70 = por %p68, %p69
      %s72 = sadd.s32 %s71, 1
      %p75 = scmp.eq.s32.totalorder %s16, 1
      %p76 = scmp.ne.s32.totalorder %s71, %s73
      %p77 = scmp.eq.s32.totalorder %s16, 0
      %p78 = por %p76, %p77
      %p79 = scmp.ne.s32.totalorder %s71, %s73
      %p80 = scmp.eq.s32.totalorder %s21, 1
      %p81 = por %p79, %p80
      %p82 = scmp.ne.s32.totalorder %s73, %s74
      %p83 = scmp.eq.s32.totalorder %s21, 0
      %p84 = por %p82, %p83
      %p85 = scmp.ne.s32.totalorder %s73, %s74
      %p86 = scmp.eq.s32.totalorder %s22, 1
      %p87 = por %p85, %p86
      %p89 = scmp.ne.s32.totalorder %s74, %s88
      %p90 = scmp.eq.s32.totalorder %s22, 0
      %p91 = por %p89, %p90
      %s92 = ssub.s32 %s16, %s23
      %p93 = scmp.eq.s32.totalorder %s92, 0
      %s95 = sadd.s32 %s94, 1
      %s96 = scalar_select %p93, %s94, %s95
      %p99 = pneg %p93
      %p100 = scmp.eq.s32.totalorder %s16, 1
      %p101 = por %p99, %p100
      %p102 = scmp.ne.s32.totalorder %s94, %s97
      %p103 = scmp.eq.s32.totalorder %s16, 0
      %p104 = por %p102, %p103
      %p105 = scmp.ne.s32.totalorder %s94, %s97
      %p106 = scmp.eq.s32.totalorder %s21, 1
      %p107 = por %p105, %p106
      %p108 = scmp.ne.s32.totalorder %s97, %s98
      %p109 = scmp.eq.s32.totalorder %s21, 0
      %p110 = por %p108, %p109
      %p111 = scmp.ne.s32.totalorder %s97, %s98
      %p112 = scmp.eq.s32.totalorder %s22, 1
      %p113 = por %p111, %p112
      %p115 = scmp.ne.s32.totalorder %s98, %s114
      %p116 = scmp.eq.s32.totalorder %s22, 0
      %p117 = por %p115, %p116
      %p118 = scmp.le.s32.totalorder 1, %s16
      %p119 = scmp.lt.s32.totalorder %s16, 3
      %p120 = pnand %p118, %p119
      %p121 = pneg %p120
      // Predicated region
      $region9: #{tpu_custom_call.1} parent=5 // pred_check
        _
      $region10: #{tpu_custom_call.1} parent=5 // pred_check_branch
        %123 = sbr.rel (%p120) target = $region12
      $region11: #{tpu_custom_call.1} parent=5 // pred_region
        %s124 = ssub.s32 %s16, 1
        // Predicated region
        $region13: #{tpu_custom_call.1} parent=11 // pred_check
          %p125 = pneg %p63
        $region14: #{tpu_custom_call.1} parent=11 // pred_check_branch
          %127 = sbr.rel (%p125) target = $region16
        $region15: #{tpu_custom_call.1} parent=11 // pred_region
          %s129 = ssub.s32 8192, 8192
          %130 = vsyncadd [#allocation6], %s129
          %s131 = sshll.u32 [#allocation5], 4
          %s132 = int_to_ptr.vmem [resolvable:$true] %s131
          %137 = dma.hbm_to_vmem [thread:$0]  %s1, 8192, %s132, [#allocation6], 128, 128, 8
        $region16: #{tpu_custom_call.1} parent=11 // pred_fallthru
          _
        // Predicated region
        $region17: #{tpu_custom_call.1} parent=11 // pred_check
          %p138 = pneg %p84
        $region18: #{tpu_custom_call.1} parent=11 // pred_check_branch
          %140 = sbr.rel (%p138) target = $region20
        $region19: #{tpu_custom_call.1} parent=11 // pred_region
          _
        $region20: #{tpu_custom_call.1} parent=11 // pred_fallthru
          _
      $region12: #{tpu_custom_call.1} parent=5 // pred_fallthru
        _
      %p141 = scmp.lt.s32.totalorder %s16, 2
      // Predicated region
      $region21: #{tpu_custom_call.1} parent=5 // pred_check
        %p142 = pneg %p141
      $region22: #{tpu_custom_call.1} parent=5 // pred_check_branch
        %144 = sbr.rel (%p142) target = $region24
      $region23: #{tpu_custom_call.1} parent=5 // pred_region
        // Predicated region
        $region25: #{tpu_custom_call.1} parent=23 // pred_check
          %p145 = pneg %p36
        $region26: #{tpu_custom_call.1} parent=23 // pred_check_branch
          %147 = sbr.rel (%p145) target = $region28
        $region27: #{tpu_custom_call.1} parent=23 // pred_region
          %s148 = sand.u32 %s26, 1
          %s149 = scalar_lea.sflag [#allocation3], %s148
          %s150 = sand.u32 %s26, 1
          %s151 = smul.addr %s150, 32
          %s152 = scalar_lea.vmem [#allocation2], %s151
          %s154 = ssub.s32 512, 512
          %155 = vsyncadd %s149, %s154
          %s156 = smul.addr %s16, 4
          %s157 = smul.addr %s156, 128
          %s158 = scalar_lea.hbm %s0, %s157
          %s160 = sshll.u32 %s152, 4
          %s161 = int_to_ptr.vmem [resolvable:$true] %s160
          %163 = dma.hbm_to_vmem [thread:$0]  %s158, 512, %s161, %s149
        $region28: #{tpu_custom_call.1} parent=23 // pred_fallthru
          _
      $region24: #{tpu_custom_call.1} parent=5 // pred_fallthru
        _
      %p164 = scmp.le.s32.totalorder 1, %s16
      %p165 = scmp.lt.s32.totalorder %s16, 3
      %p166 = pnand %p164, %p165
      %p167 = pneg %p166
      // Predicated region
      $region29: #{tpu_custom_call.1} parent=5 // pred_check
        _
      $region30: #{tpu_custom_call.1} parent=5 // pred_check_branch
        %169 = sbr.rel (%p166) target = $region32
      $region31: #{tpu_custom_call.1} parent=5 // pred_region
        %s170 = ssub.s32 %s16, 1
        %s171 = sand.u32 %s29, 1
        %s172 = scalar_lea.sflag [#allocation3], %s171
        %s173 = sand.u32 %s29, 1
        %s174 = smul.addr %s173, 32
        %s175 = scalar_lea.vmem [#allocation2], %s174
        // Predicated region
        $region33: #{tpu_custom_call.1} parent=31 // pred_check
          %p176 = pneg %p42
        $region34: #{tpu_custom_call.1} parent=31 // pred_check_branch
          %178 = sbr.rel (%p176) target = $region36
        $region35: #{tpu_custom_call.1} parent=31 // pred_region
          %179 = dma.done %s172, 512
        $region36: #{tpu_custom_call.1} parent=31 // pred_fallthru
          _
        // Predicated region
        $region37: #{tpu_custom_call.1} parent=31 // pred_check
          %p180 = pneg %p63
        $region38: #{tpu_custom_call.1} parent=31 // pred_check_branch
          %182 = sbr.rel (%p180) target = $region40
        $region39: #{tpu_custom_call.1} parent=31 // pred_region
          %183 = dma.done [#allocation6], 8192
        $region40: #{tpu_custom_call.1} parent=31 // pred_fallthru
          _
        %s184 = sand.u32 %s29, 1
        %s185 = scalar_lea.sflag [#allocation3], %s184
        %s186 = sand.u32 %s29, 1
        %s187 = smul.addr %s186, 32
        %s188 = scalar_lea.vmem [#allocation2], %s187
        %p189 = pneg %p42
        %p190 = pneg %p39
        %p191 = pneg %p63
        %p192 = pneg %p60
        %p193 = pneg %p84
        %p194 = pneg %p81
        %p195 = pneg %p110
        %p196 = pneg %p107
        %s197 = sand.u32 %s97, 1
        %s198 = scalar_lea.sflag [#allocation4], %s197
        %s199 = sand.u32 %s97, 1
        %s200 = smul.addr %s199, 8
        %s201 = scalar_lea.vmem [#allocation7], %s200
        %v202 = vld [vmem:[%s175] sm:$0xff]
        %v203 = vld [vmem:[%s175 + $0x8] sm:$0xff]
        %v204 = vld [vmem:[%s175 + $0x10] sm:$0xff]
        %v205 = vld [vmem:[%s175 + $0x18] sm:$0xff]
        %v206 = vld [vmem:[#allocation5] sm:$0xff]
        %v207 = vld [vmem:[#allocation5 + $0x8] sm:$0xff]
        %v208 = vld [vmem:[#allocation5 + $0x10] sm:$0xff]
        %v209 = vld [vmem:[#allocation5 + $0x18] sm:$0xff]
        %v210 = vld [vmem:[#allocation5 + $0x20] sm:$0xff]
        %v211 = vld [vmem:[#allocation5 + $0x28] sm:$0xff]
        %v212 = vld [vmem:[#allocation5 + $0x30] sm:$0xff]
        %v213 = vld [vmem:[#allocation5 + $0x38] sm:$0xff]
        %v214 = vld [vmem:[#allocation5 + $0x40] sm:$0xff]
        %v215 = vld [vmem:[#allocation5 + $0x48] sm:$0xff]
        %v216 = vld [vmem:[#allocation5 + $0x50] sm:$0xff]
        %v217 = vld [vmem:[#allocation5 + $0x58] sm:$0xff]
        %v218 = vld [vmem:[#allocation5 + $0x60] sm:$0xff]
        %v219 = vld [vmem:[#allocation5 + $0x68] sm:$0xff]
        %v220 = vld [vmem:[#allocation5 + $0x70] sm:$0xff]
        %v221 = vld [vmem:[#allocation5 + $0x78] sm:$0xff]
        %v222 = vld [vmem:[#allocation5 + $0x80] sm:$0xff]
        %v223 = vld [vmem:[#allocation5 + $0x88] sm:$0xff]
        %v224 = vld [vmem:[#allocation5 + $0x90] sm:$0xff]
        %v225 = vld [vmem:[#allocation5 + $0x98] sm:$0xff]
        %v226 = vld [vmem:[#allocation5 + $0xa0] sm:$0xff]
        %v227 = vld [vmem:[#allocation5 + $0xa8] sm:$0xff]
        %v228 = vld [vmem:[#allocation5 + $0xb0] sm:$0xff]
        %v229 = vld [vmem:[#allocation5 + $0xb8] sm:$0xff]
        %v230 = vld [vmem:[#allocation5 + $0xc0] sm:$0xff]
        %v231 = vld [vmem:[#allocation5 + $0xc8] sm:$0xff]
        %v232 = vld [vmem:[#allocation5 + $0xd0] sm:$0xff]
        %v233 = vld [vmem:[#allocation5 + $0xd8] sm:$0xff]
        %v234 = vld [vmem:[#allocation5 + $0xe0] sm:$0xff]
        %v235 = vld [vmem:[#allocation5 + $0xe8] sm:$0xff]
        %v236 = vld [vmem:[#allocation5 + $0xf0] sm:$0xff]
        %v237 = vld [vmem:[#allocation5 + $0xf8] sm:$0xff]
        %v238 = vld [vmem:[#allocation5 + $0x100] sm:$0xff]
        %v239 = vld [vmem:[#allocation5 + $0x108] sm:$0xff]
        %v240 = vld [vmem:[#allocation5 + $0x110] sm:$0xff]
        %v241 = vld [vmem:[#allocation5 + $0x118] sm:$0xff]
        %v242 = vld [vmem:[#allocation5 + $0x120] sm:$0xff]
        %v243 = vld [vmem:[#allocation5 + $0x128] sm:$0xff]
        %v244 = vld [vmem:[#allocation5 + $0x130] sm:$0xff]
        %v245 = vld [vmem:[#allocation5 + $0x138] sm:$0xff]
        %v246 = vld [vmem:[#allocation5 + $0x140] sm:$0xff]
        %v247 = vld [vmem:[#allocation5 + $0x148] sm:$0xff]
        %v248 = vld [vmem:[#allocation5 + $0x150] sm:$0xff]
        %v249 = vld [vmem:[#allocation5 + $0x158] sm:$0xff]
        %v250 = vld [vmem:[#allocation5 + $0x160] sm:$0xff]
        %v251 = vld [vmem:[#allocation5 + $0x168] sm:$0xff]
        %v252 = vld [vmem:[#allocation5 + $0x170] sm:$0xff]
        %v253 = vld [vmem:[#allocation5 + $0x178] sm:$0xff]
        %v254 = vld [vmem:[#allocation5 + $0x180] sm:$0xff]
        %v255 = vld [vmem:[#allocation5 + $0x188] sm:$0xff]
        %v256 = vld [vmem:[#allocation5 + $0x190] sm:$0xff]
        %v257 = vld [vmem:[#allocation5 + $0x198] sm:$0xff]
        %v258 = vld [vmem:[#allocation5 + $0x1a0] sm:$0xff]
        %v259 = vld [vmem:[#allocation5 + $0x1a8] sm:$0xff]
        %v260 = vld [vmem:[#allocation5 + $0x1b0] sm:$0xff]
        %v261 = vld [vmem:[#allocation5 + $0x1b8] sm:$0xff]
        %v262 = vld [vmem:[#allocation5 + $0x1c0] sm:$0xff]
        %v263 = vld [vmem:[#allocation5 + $0x1c8] sm:$0xff]
        %v264 = vld [vmem:[#allocation5 + $0x1d0] sm:$0xff]
        %v265 = vld [vmem:[#allocation5 + $0x1d8] sm:$0xff]
        %v266 = vld [vmem:[#allocation5 + $0x1e0] sm:$0xff]
        %v267 = vld [vmem:[#allocation5 + $0x1e8] sm:$0xff]
        %v268 = vld [vmem:[#allocation5 + $0x1f0] sm:$0xff]
        %v269 = vld [vmem:[#allocation5 + $0x1f8] sm:$0xff]
        %v270 = vld [vmem:[%s2] sm:$0x1]
        %v272 = vlaneseq
        %v273 = vshrl.u32 %v272, 7
        %v274 = vsub.s32 0, %v273
        %v275 = vrot.slane %v270, %v274
        %277 = vmatprep.subr.mxu0 0.0
        %278 = vmatpush1.msra.mxu0 %v206
        %279 = vmatprep.subr.mxu0 0.0
        %280 = vmatpush1.msra.mxu0 %v207
        %281 = vmatprep.subr.mxu0 0.0
        %282 = vmatpush1.msra.mxu0 %v208
        %283 = vmatprep.subr.mxu0 0.0
        %284 = vmatpush1.msra.mxu0 %v209
        %285 = vmatprep.subr.mxu0 0.0
        %286 = vmatpush1.msra.mxu0 %v210
        %287 = vmatprep.subr.mxu0 0.0
        %288 = vmatpush1.msra.mxu0 %v211
        %289 = vmatprep.subr.mxu0 0.0
        %290 = vmatpush1.msra.mxu0 %v212
        %291 = vmatprep.subr.mxu0 0.0
        %292 = vmatpush1.msra.mxu0 %v213
        %293 = vmatprep.subr.mxu0 0.0
        %294 = vmatpush1.msra.mxu0 %v214
        %295 = vmatprep.subr.mxu0 0.0
        %296 = vmatpush1.msra.mxu0 %v215
        %297 = vmatprep.subr.mxu0 0.0
        %298 = vmatpush1.msra.mxu0 %v216
        %299 = vmatprep.subr.mxu0 0.0
        %300 = vmatpush1.msra.mxu0 %v217
        %301 = vmatprep.subr.mxu0 0.0
        %302 = vmatpush1.msra.mxu0 %v218
        %303 = vmatprep.subr.mxu0 0.0
        %304 = vmatpush1.msra.mxu0 %v219
        %305 = vmatprep.subr.mxu0 0.0
        %306 = vmatpush1.msra.mxu0 %v220
        %307 = vmatprep.subr.mxu0 0.0
        %308 = vmatpush1.msra.mxu0 %v221
        %309 = vmatprep.subr.mxu0 0.0
        %310 = vmatpush1.msra.mxu0 %v222
        %311 = vmatprep.subr.mxu0 0.0
        %312 = vmatpush1.msra.mxu0 %v223
        %313 = vmatprep.subr.mxu0 0.0
        %314 = vmatpush1.msra.mxu0 %v224
        %315 = vmatprep.subr.mxu0 0.0
        %316 = vmatpush1.msra.mxu0 %v225
        %317 = vmatprep.subr.mxu0 0.0
        %318 = vmatpush1.msra.mxu0 %v226
        %319 = vmatprep.subr.mxu0 0.0
        %320 = vmatpush1.msra.mxu0 %v227
        %321 = vmatprep.subr.mxu0 0.0
        %322 = vmatpush1.msra.mxu0 %v228
        %323 = vmatprep.subr.mxu0 0.0
        %324 = vmatpush1.msra.mxu0 %v229
        %325 = vmatprep.subr.mxu0 0.0
        %326 = vmatpush1.msra.mxu0 %v230
        %327 = vmatprep.subr.mxu0 0.0
        %328 = vmatpush1.msra.mxu0 %v231
        %329 = vmatprep.subr.mxu0 0.0
        %330 = vmatpush1.msra.mxu0 %v232
        %331 = vmatprep.subr.mxu0 0.0
        %332 = vmatpush1.msra.mxu0 %v233
        %333 = vmatprep.subr.mxu0 0.0
        %334 = vmatpush1.msra.mxu0 %v234
        %335 = vmatprep.subr.mxu0 0.0
        %336 = vmatpush1.msra.mxu0 %v235
        %337 = vmatprep.subr.mxu0 0.0
        %338 = vmatpush1.msra.mxu0 %v236
        %339 = vmatprep.subr.mxu0 0.0
        %340 = vmatpush1.msra.mxu0 %v237
        %341 = vmatprep.mubr.f32.mxu0 %v203
        %342 = vmatmul.mubr.f32.gmra.mrb[0].mxu0 %v202
        %v343 = vpop.f32.mrb[0].mxu0
        %v344 = vadd.f32 %v275, %v343
        %v345 = vpop.f32.mrb[0].mxu0
        %346 = vdwg.mxu0
        %347 = vmatprep.subr.mxu0 0.0
        %348 = vmatpush1.msra.mxu0 %v238
        %349 = vmatprep.subr.mxu0 0.0
        %350 = vmatpush1.msra.mxu0 %v239
        %351 = vmatprep.subr.mxu0 0.0
        %352 = vmatpush1.msra.mxu0 %v240
        %353 = vmatprep.subr.mxu0 0.0
        %354 = vmatpush1.msra.mxu0 %v241
        %355 = vmatprep.subr.mxu0 0.0
        %356 = vmatpush1.msra.mxu0 %v242
        %357 = vmatprep.subr.mxu0 0.0
        %358 = vmatpush1.msra.mxu0 %v243
        %359 = vmatprep.subr.mxu0 0.0
        %360 = vmatpush1.msra.mxu0 %v244
        %361 = vmatprep.subr.mxu0 0.0
        %362 = vmatpush1.msra.mxu0 %v245
        %363 = vmatprep.subr.mxu0 0.0
        %364 = vmatpush1.msra.mxu0 %v246
        %365 = vmatprep.subr.mxu0 0.0
        %366 = vmatpush1.msra.mxu0 %v247
        %367 = vmatprep.subr.mxu0 0.0
        %368 = vmatpush1.msra.mxu0 %v248
        %369 = vmatprep.subr.mxu0 0.0
        %370 = vmatpush1.msra.mxu0 %v249
        %371 = vmatprep.subr.mxu0 0.0
        %372 = vmatpush1.msra.mxu0 %v250
        %373 = vmatprep.subr.mxu0 0.0
        %374 = vmatpush1.msra.mxu0 %v251
        %375 = vmatprep.subr.mxu0 0.0
        %376 = vmatpush1.msra.mxu0 %v252
        %377 = vmatprep.subr.mxu0 0.0
        %378 = vmatpush1.msra.mxu0 %v253
        %379 = vmatprep.subr.mxu0 0.0
        %380 = vmatpush1.msra.mxu0 %v254
        %381 = vmatprep.subr.mxu0 0.0
        %382 = vmatpush1.msra.mxu0 %v255
        %383 = vmatprep.subr.mxu0 0.0
        %384 = vmatpush1.msra.mxu0 %v256
        %385 = vmatprep.subr.mxu0 0.0
        %386 = vmatpush1.msra.mxu0 %v257
        %387 = vmatprep.subr.mxu0 0.0
        %388 = vmatpush1.msra.mxu0 %v258
        %389 = vmatprep.subr.mxu0 0.0
        %390 = vmatpush1.msra.mxu0 %v259
        %391 = vmatprep.subr.mxu0 0.0
        %392 = vmatpush1.msra.mxu0 %v260
        %393 = vmatprep.subr.mxu0 0.0
        %394 = vmatpush1.msra.mxu0 %v261
        %395 = vmatprep.subr.mxu0 0.0
        %396 = vmatpush1.msra.mxu0 %v262
        %397 = vmatprep.subr.mxu0 0.0
        %398 = vmatpush1.msra.mxu0 %v263
        %399 = vmatprep.subr.mxu0 0.0
        %400 = vmatpush1.msra.mxu0 %v264
        %401 = vmatprep.subr.mxu0 0.0
        %402 = vmatpush1.msra.mxu0 %v265
        %403 = vmatprep.subr.mxu0 0.0
        %404 = vmatpush1.msra.mxu0 %v266
        %405 = vmatprep.subr.mxu0 0.0
        %406 = vmatpush1.msra.mxu0 %v267
        %407 = vmatprep.subr.mxu0 0.0
        %408 = vmatpush1.msra.mxu0 %v268
        %409 = vmatprep.subr.mxu0 0.0
        %410 = vmatpush1.msra.mxu0 %v269
        %411 = vmatprep.mubr.f32.mxu0 %v205
        %412 = vmatmul.mubr.f32.gmra.mrb[0].mxu0 %v204
        %v413 = vpop.f32.mrb[0].mxu0
        %v414 = vadd.f32 %v344, %v413
        %v415 = vpop.f32.mrb[0].mxu0
        %416 = vdwg.mxu0
        %417 = vmax.xlane.f32.xlu0 %v414
        %v418 = vpop.xlane.xlu0 %417
        %v419 = vsub.f32 %v414, %v418
        %v420 = vmul.f32 %v419, 1.442695
        %v421 = vpow.pop %v420
        %422 = vadd.xlane.f32.xlu0 %v421
        %v423 = vpop.xlane.xlu0 %422
        %v424 = vlog2.pop %v423
        %v425 = vmul.f32 %v424, 0.6931472
        %v426 = vsub.f32 %v419, %v425
        %427 = vst [vmem:[%s201] sm:$0xff] %v426
        %s428 = sand.u32 %s97, 1
        %s429 = scalar_lea.sflag [#allocation4], %s428
        %s430 = sand.u32 %s97, 1
        %s431 = smul.addr %s430, 8
        %s432 = scalar_lea.vmem [#allocation7], %s431
        // Predicated region
        $region41: #{tpu_custom_call.1} parent=31 // pred_check
          %p433 = pneg %p107
        $region42: #{tpu_custom_call.1} parent=31 // pred_check_branch
          %435 = sbr.rel (%p433) target = $region44
        $region43: #{tpu_custom_call.1} parent=31 // pred_region
          %s437 = ssub.s32 128, 128
          %438 = vsyncadd %s429, %s437
          %s439 = smul.addr %s21, 128
          %s440 = scalar_lea.hbm %s3, %s439
          %s442 = sshll.u32 %s432, 4
          %s443 = int_to_ptr.vmem [resolvable:$true] %s442
          %445 = dma.vmem_to_hbm [thread:$0]  %s443, 128, %s440, %s429
        $region44: #{tpu_custom_call.1} parent=31 // pred_fallthru
          _
      $region32: #{tpu_custom_call.1} parent=5 // pred_fallthru
        _
      %p446 = scmp.le.s32.totalorder 2, %s16
      // Predicated region
      $region45: #{tpu_custom_call.1} parent=5 // pred_check
        %p447 = pneg %p446
      $region46: #{tpu_custom_call.1} parent=5 // pred_check_branch
        %449 = sbr.rel (%p447) target = $region48
      $region47: #{tpu_custom_call.1} parent=5 // pred_region
        %s450 = ssub.s32 %s16, 2
        // Predicated region
        $region49: #{tpu_custom_call.1} parent=47 // pred_check
          %p451 = pneg %p113
        $region50: #{tpu_custom_call.1} parent=47 // pred_check_branch
          %453 = sbr.rel (%p451) target = $region52
        $region51: #{tpu_custom_call.1} parent=47 // pred_region
          %s454 = sand.u32 %s98, 1
          %s455 = scalar_lea.sflag [#allocation4], %s454
          %s456 = sand.u32 %s98, 1
          %s457 = smul.addr %s456, 8
          %s458 = scalar_lea.vmem [#allocation7], %s457
          %459 = dma.done %s455, 128
        $region52: #{tpu_custom_call.1} parent=47 // pred_fallthru
          _
      $region48: #{tpu_custom_call.1} parent=5 // pred_fallthru
        _
    $region6: #{tpu_custom_call.1} parent=1 // loop_footer
      %s20 = sadd.s32 1, %s16
    $region7: #{tpu_custom_call.1} parent=1 // loop_footer_branch
      %15 = sbr.rel target = $region3
    $region8: #{tpu_custom_call.1} parent=1 // loop_exit
      _
    %460 = vsyncpa [#allocation3], 1
    %s461 = scalar_lea.sflag [#allocation3], 1
    %462 = vsyncpa %s461, 1
    %463 = vsyncpa [#allocation6], 1
    %464 = vsyncpa [#allocation4], 1
    %s465 = scalar_lea.sflag [#allocation4], 1
    %466 = vsyncpa %s465, 1

</llo_original>
